<compile_context>
chip_gen: v6e
topology: v6e:2x2x1
jax: 0.10.0
libtpu: 0.0.40
codegen_flags: <defaults>
</compile_context>

<pallas_src>
import jax
import jax.numpy as jnp
from jax.experimental import pallas as pl
from jax.experimental.pallas import tpu as pltpu


# ----------------------------------------------------------------------------
# Kernel
# ----------------------------------------------------------------------------
def _make_mfp_kernel(num_layers: int, compute_dtype):
    """Fused: x -> L0 -> ReLU -> L1 -> ReLU -> ... -> L_last (no final ReLU)."""

    def kernel(*refs):
        # refs = (x_ref, w0, b0, w1, b1, ..., w_{L-1}, b_{L-1}, out_ref)
        x_ref = refs[0]
        out_ref = refs[-1]
        # One in-VMEM down-cast of the streamed f32 block -> native bf16 MXU.
        x = x_ref[...].astype(compute_dtype)
        for i in range(num_layers):
            w = refs[1 + 2 * i][...]            # (in_bd, out_bd), compute_dtype
            b = refs[2 + 2 * i][...]            # (1, out_bd), float32
            y = jnp.dot(x, w, preferred_element_type=jnp.float32) + b
            if i < num_layers - 1:
                x = jnp.maximum(y, 0.0).astype(compute_dtype)
            else:
                x = y                           # keep f32 for the output store
        out_ref[...] = x.astype(out_ref.dtype)

    return kernel


# ----------------------------------------------------------------------------
# Tiling
# ----------------------------------------------------------------------------
def _choose_batch_tile(n_folded: int, *, cap: int = 2048, min_steps: int = 2) -> int:
    """Tile over folded rows. Big tiles amortize per-step overhead; keep at
    least `min_steps` steps for large batches (two TensorCores on v7x)."""
    if n_folded <= 64:
        return n_folded                         # single full-array block
    tile = min(cap, pl.cdiv(n_folded, min_steps))
    return int(((tile + 7) // 8) * 8)           # sublane-aligned


def _normalize_tile(tile: int, n_folded: int) -> int:
    tile = min(tile, n_folded)
    if tile != n_folded and tile % 8 != 0:
        tile = min(((tile + 7) // 8) * 8, n_folded)
    return max(tile, 1)


# ----------------------------------------------------------------------------
# Wrapper
# ----------------------------------------------------------------------------
def mfp_forward(observation, weights, biases, *, fold: int = 8, batch_tile=None,
                compute_dtype=jnp.bfloat16, out_dtype=jnp.float32,
                split_output: bool = True):
    """Fused MFP forward pass.

    observation: (N, observation_size) float32
    weights:     list of (in_dim, out_dim) float32
    biases:      list of (out_dim,) float32
    Returns a list of mean_action_size arrays of shape (N, 1) (module
    convention), or the dense (N, mean_action_size) array if
    split_output=False.
    """
    n, obs_size = observation.shape
    num_layers = len(weights)
    act_size = weights[-1].shape[1]

    # --- fold `fold` rows into the lane axis (lane-dense layout) -----------
    n_pad = ((n + fold - 1) // fold) * fold
    obs = observation
    if n_pad != n:
        # TODO(synk): tail rows force one small pad copy; callers with
        # N % fold == 0 hit the zero-copy path.
        obs = jnp.pad(obs, ((0, n_pad - n), (0, 0)))
    n_folded = n_pad // fold
    folded_in = fold * obs_size
    folded_out = fold * act_size
    obs_f = obs.reshape(n_folded, folded_in)         # free contiguous reshape

    # Block-diagonal (fold x) weights / tiled biases: VMEM-resident params.
    eye = jnp.eye(fold, dtype=jnp.float32)
    w_bd = [jnp.kron(eye, w.astype(jnp.float32)).astype(compute_dtype)
            for w in weights]
    b_bd = [jnp.tile(b.astype(jnp.float32), fold).reshape(1, -1) for b in biases]

    # --- grid / specs -------------------------------------------------------
    tile = batch_tile if batch_tile is not None else _choose_batch_tile(n_folded)
    tile = _normalize_tile(tile, n_folded)
    grid = (pl.cdiv(n_folded, tile),)

    in_specs = [pl.BlockSpec((tile, folded_in), lambda i: (i, 0))]
    flat_params = []
    for w, b in zip(w_bd, b_bd):
        in_specs.append(pl.BlockSpec(w.shape, lambda i: (0, 0)))
        in_specs.append(pl.BlockSpec(b.shape, lambda i: (0, 0)))
        flat_params.extend([w, b])
    out_spec = pl.BlockSpec((tile, folded_out), lambda i: (i, 0))

    # Advisory cost estimate so XLA can schedule around the custom call.
    flops = 2 * n_folded * sum(int(w.shape[0]) * int(w.shape[1]) for w in w_bd)
    bytes_accessed = (
        obs_f.size * obs_f.dtype.itemsize
        + n_folded * folded_out * jnp.dtype(out_dtype).itemsize
        + sum(p.size * p.dtype.itemsize for p in flat_params))

    out = pl.pallas_call(
        _make_mfp_kernel(num_layers, compute_dtype),
        out_shape=jax.ShapeDtypeStruct((n_folded, folded_out), out_dtype),
        grid_spec=pltpu.PrefetchScalarGridSpec(
            num_scalar_prefetch=0,
            grid=grid,
            in_specs=in_specs,
            out_specs=out_spec,
        ),
        compiler_params=pltpu.CompilerParams(
            dimension_semantics=("parallel",)),
        cost_estimate=pl.CostEstimate(
            flops=int(flops), transcendentals=0,
            bytes_accessed=int(bytes_accessed)),
    )(obs_f, *flat_params)

    out = out.reshape(n_pad, act_size)                # free contiguous reshape
    if n_pad != n:
        out = out[:n]
    if not split_output:
        return out
    # Module convention: list of (N, 1) columns.
    return jnp.split(out, act_size, axis=1)


# ----------------------------------------------------------------------------
# Params / reference
# ----------------------------------------------------------------------------
def init_mfp_params(key, observation_size, mean_action_size, hidden_dims):
    """Deterministic init mirroring nn.Linear's default U(-1/sqrt(fan_in), .)."""
    layer_dims = []
    for i in range(len(hidden_dims)):
        in_d = observation_size if i == 0 else hidden_dims[i - 1]
        layer_dims.append((in_d, hidden_dims[i]))
    layer_dims.append((hidden_dims[-1], mean_action_size))

    weights, biases = [], []
    for (in_d, out_d) in layer_dims:
        key, kw, kb = jax.random.split(key, 3)
        bound = 1.0 / jnp.sqrt(in_d)
        # Stored as (in_dim, out_dim): transpose of PyTorch's (out, in) weight.
        w = jax.random.uniform(kw, (in_d, out_d), jnp.float32, -bound, bound)
        b = jax.random.uniform(kb, (out_d,), jnp.float32, -bound, bound)
        weights.append(w)
        biases.append(b)
    return weights, biases


def mfp_reference(observation, weights, biases):
    """Pure-JAX f32 reference of the same forward pass (dense output)."""
    x = observation
    num_layers = len(weights)
    for i in range(num_layers):
        x = x @ weights[i] + biases[i]
        if i < num_layers - 1:
            x = jnp.maximum(x, 0.0)
    return x


# ----------------------------------------------------------------------------
# Smoke test
# ----------------------------------------------------------------------------
if __name__ == "__main__":
    N = 8
    observation_size = 16
    mean_action_size = 4
    hidden_dims = [32, 32]

    key = jax.random.PRNGKey(0)
    key, k_obs = jax.random.split(key)
    observation = jax.random.normal(k_obs, (N, observation_size), jnp.float32)

    weights, biases = init_mfp_params(
        key, observation_size, mean_action_size, hidden_dims)

    ref = mfp_reference(observation, weights, biases)

    # 1) f32 compute path, module-style split output.
    m_act = mfp_forward(observation, weights, biases,
                        compute_dtype=jnp.float32)
    m_act = jax.block_until_ready(m_act)
    assert len(m_act) == mean_action_size
    for i, got in enumerate(m_act):
        assert got.shape == (N, 1)
        assert jnp.allclose(got[:, 0], ref[:, i], atol=5e-3, rtol=5e-3)

    # 2) Default bf16 compute path (looser tolerance from bf16 MXU inputs).
    m_act_bf16 = jax.block_until_ready(mfp_forward(observation, weights, biases))
    for i, got in enumerate(m_act_bf16):
        assert got.shape == (N, 1)
        assert jnp.allclose(got[:, 0], ref[:, i], atol=3e-2, rtol=3e-2)

    # 3) N not a multiple of the fold: exercises the pad + trim path.
    N2 = 300
    key, k2 = jax.random.split(key)
    obs2 = jax.random.normal(k2, (N2, observation_size), jnp.float32)
    ref2 = mfp_reference(obs2, weights, biases)
    out2 = jax.block_until_ready(
        mfp_forward(obs2, weights, biases, split_output=False))
    assert out2.shape == (N2, mean_action_size)
    assert jnp.allclose(out2, ref2, atol=3e-2, rtol=3e-2)

    # 4) Multi-step, ragged grid: folded rows = 75, tile = 32 -> 3 steps,
    #    last block partial (Pallas boundary masking, no explicit pad).
    N3 = 600
    key, k3 = jax.random.split(key)
    obs3 = jax.random.normal(k3, (N3, observation_size), jnp.float32)
    ref3 = mfp_reference(obs3, weights, biases)
    out3 = jax.block_until_ready(
        mfp_forward(obs3, weights, biases, batch_tile=32, split_output=False))
    assert out3.shape == (N3, mean_action_size)
    assert jnp.allclose(out3, ref3, atol=3e-2, rtol=3e-2)

    print("KERNEL_OK")
</pallas_src>

<mosaic_0001>
module attributes {stable_mosaic.version = 11 : i64} {
  func.func @kernel(%arg0: i32, %arg1: memref<1x128xf32, #tpu.memory_space<vmem>>, %arg2: memref<128x256xf32, #tpu.memory_space<vmem>>, %arg3: memref<1x256xf32, #tpu.memory_space<vmem>>, %arg4: memref<256x256xf32, #tpu.memory_space<vmem>>, %arg5: memref<1x256xf32, #tpu.memory_space<vmem>>, %arg6: memref<256x32xf32, #tpu.memory_space<vmem>>, %arg7: memref<1x32xf32, #tpu.memory_space<vmem>>, %arg8: memref<1x32xf32, #tpu.memory_space<vmem>>) attributes {dimension_semantics = [#tpu.dimension_semantics<parallel>], iteration_bounds = array<i64: 1>, scalar_prefetch = 0 : i64, scratch_operands = 0 : i64, tpu.core_type = #tpu.core_type<tc>, window_params = [{transform_indices = @transform_0, window_bounds = array<i64: 1, 128>}, {pipeline_mode = #tpu.pipeline_mode<synchronous>, transform_indices = @transform_1, window_bounds = array<i64: 128, 256>}, {pipeline_mode = #tpu.pipeline_mode<synchronous>, transform_indices = @transform_2, window_bounds = array<i64: 1, 256>}, {pipeline_mode = #tpu.pipeline_mode<synchronous>, transform_indices = @transform_3, window_bounds = array<i64: 256, 256>}, {pipeline_mode = #tpu.pipeline_mode<synchronous>, transform_indices = @transform_4, window_bounds = array<i64: 1, 256>}, {pipeline_mode = #tpu.pipeline_mode<synchronous>, transform_indices = @transform_5, window_bounds = array<i64: 256, 32>}, {pipeline_mode = #tpu.pipeline_mode<synchronous>, transform_indices = @transform_6, window_bounds = array<i64: 1, 32>}, {transform_indices = @transform_7, window_bounds = array<i64: 1, 32>}]} {
    %c0 = arith.constant 0 : index
    %c0_0 = arith.constant 0 : index
    %0 = vector.load %arg1[%c0, %c0_0] : memref<1x128xf32, #tpu.memory_space<vmem>>, vector<1x128xf32>
    %c0_1 = arith.constant 0 : index
    %c0_2 = arith.constant 0 : index
    %1 = vector.load %arg2[%c0_1, %c0_2] : memref<128x256xf32, #tpu.memory_space<vmem>>, vector<128x256xf32>
    %c0_3 = arith.constant 0 : index
    %c0_4 = arith.constant 0 : index
    %2 = vector.load %arg3[%c0_3, %c0_4] : memref<1x256xf32, #tpu.memory_space<vmem>>, vector<1x256xf32>
    %cst = arith.constant dense<0.000000e+00> : vector<1x256xf32>
    %3 = tpu.matmul %0, %1, %cst {dimension_numbers = #tpu.dot_dimension_numbers<[1], [0], [0], [1], [0, 0, 1, 1], [], []>} : vector<1x128xf32>, vector<128x256xf32>, vector<1x256xf32> -> vector<1x256xf32>
    %4 = arith.addf %3, %2 : vector<1x256xf32>
    %cst_5 = arith.constant 0.000000e+00 : f32
    %5 = vector.broadcast %cst_5 : f32 to vector<1x256xf32>
    %6 = arith.maximumf %4, %5 : vector<1x256xf32>
    %c0_6 = arith.constant 0 : index
    %c0_7 = arith.constant 0 : index
    %7 = vector.load %arg4[%c0_6, %c0_7] : memref<256x256xf32, #tpu.memory_space<vmem>>, vector<256x256xf32>
    %c0_8 = arith.constant 0 : index
    %c0_9 = arith.constant 0 : index
    %8 = vector.load %arg5[%c0_8, %c0_9] : memref<1x256xf32, #tpu.memory_space<vmem>>, vector<1x256xf32>
    %cst_10 = arith.constant dense<0.000000e+00> : vector<1x256xf32>
    %9 = tpu.matmul %6, %7, %cst_10 {dimension_numbers = #tpu.dot_dimension_numbers<[1], [0], [0], [1], [0, 0, 1, 1], [], []>} : vector<1x256xf32>, vector<256x256xf32>, vector<1x256xf32> -> vector<1x256xf32>
    %10 = arith.addf %9, %8 : vector<1x256xf32>
    %cst_11 = arith.constant 0.000000e+00 : f32
    %11 = vector.broadcast %cst_11 : f32 to vector<1x256xf32>
    %12 = arith.maximumf %10, %11 : vector<1x256xf32>
    %c0_12 = arith.constant 0 : index
    %c0_13 = arith.constant 0 : index
    %13 = vector.load %arg6[%c0_12, %c0_13] : memref<256x32xf32, #tpu.memory_space<vmem>>, vector<256x32xf32>
    %c0_14 = arith.constant 0 : index
    %c0_15 = arith.constant 0 : index
    %14 = vector.load %arg7[%c0_14, %c0_15] : memref<1x32xf32, #tpu.memory_space<vmem>>, vector<1x32xf32>
    %cst_16 = arith.constant dense<0.000000e+00> : vector<1x32xf32>
    %15 = tpu.matmul %12, %13, %cst_16 {dimension_numbers = #tpu.dot_dimension_numbers<[1], [0], [0], [1], [0, 0, 1, 1], [], []>} : vector<1x256xf32>, vector<256x32xf32>, vector<1x32xf32> -> vector<1x32xf32>
    %16 = arith.addf %15, %14 : vector<1x32xf32>
    %c0_17 = arith.constant 0 : index
    %c0_18 = arith.constant 0 : index
    %17 = vector.load %arg8[%c0_17, %c0_18] : memref<1x32xf32, #tpu.memory_space<vmem>>, vector<1x32xf32>
    tpu.vector_store %arg8[%c0_17, %c0_18], %16 {strides = array<i32>} : memref<1x32xf32, #tpu.memory_space<vmem>>, vector<1x32xf32>,
    return
  }
  func.func @transform_0(%arg0: i32) -> (i32, i32) {
    %c0_i32 = arith.constant 0 : i32
    %c0_i32_0 = arith.constant 0 : i32
    return %arg0, %c0_i32 : i32, i32
  }
  func.func @transform_1(%arg0: i32) -> (i32, i32) {
    %c0_i32 = arith.constant 0 : i32
    %c0_i32_0 = arith.constant 0 : i32
    %c0_i32_1 = arith.constant 0 : i32
    return %c0_i32, %c0_i32_0 : i32, i32
  }
  func.func @transform_2(%arg0: i32) -> (i32, i32) {
    %c0_i32 = arith.constant 0 : i32
    %c0_i32_0 = arith.constant 0 : i32
    %c0_i32_1 = arith.constant 0 : i32
    return %c0_i32, %c0_i32_0 : i32, i32
  }
  func.func @transform_3(%arg0: i32) -> (i32, i32) {
    %c0_i32 = arith.constant 0 : i32
    %c0_i32_0 = arith.constant 0 : i32
    %c0_i32_1 = arith.constant 0 : i32
    return %c0_i32, %c0_i32_0 : i32, i32
  }
  func.func @transform_4(%arg0: i32) -> (i32, i32) {
    %c0_i32 = arith.constant 0 : i32
    %c0_i32_0 = arith.constant 0 : i32
    %c0_i32_1 = arith.constant 0 : i32
    return %c0_i32, %c0_i32_0 : i32, i32
  }
  func.func @transform_5(%arg0: i32) -> (i32, i32) {
    %c0_i32 = arith.constant 0 : i32
    %c0_i32_0 = arith.constant 0 : i32
    %c0_i32_1 = arith.constant 0 : i32
    return %c0_i32, %c0_i32_0 : i32, i32
  }
  func.func @transform_6(%arg0: i32) -> (i32, i32) {
    %c0_i32 = arith.constant 0 : i32
    %c0_i32_0 = arith.constant 0 : i32
    %c0_i32_1 = arith.constant 0 : i32
    return %c0_i32, %c0_i32_0 : i32, i32
  }
  func.func @transform_7(%arg0: i32) -> (i32, i32) {
    %c0_i32 = arith.constant 0 : i32
    %c0_i32_0 = arith.constant 0 : i32
    return %arg0, %c0_i32 : i32, i32
  }
}

</mosaic_0001>

<llo_original>
// kernel: tpu_custom_call.1
$region0: #{tpu_custom_call.1}
  #allocation0 [shape = 'u32[]', space=smem, size = 0x4, offset = 0x4, fixed_abs, tag = 'smem constant byte address 0x4 - core index']
  #allocation1 [shape = 'u32[144,128]{1,0:T(1,128)}', space=vmem, size = 0x12000, scoped, tag = 'internal scratch']
  %s0 = inlined_call_operand.vmem [shape: f32[1,128], index: 0, kind: input, shape index: {}]
  %s1 = inlined_call_operand.vmem [shape: f32[128,256], index: 1, kind: input, shape index: {}]
  %s2 = inlined_call_operand.vmem [shape: f32[1,256], index: 2, kind: input, shape index: {}]
  %s3 = inlined_call_operand.hbm [shape: f32[256,256], index: 3, kind: input, shape index: {}]
  %s4 = inlined_call_operand.vmem [shape: f32[1,256], index: 4, kind: input, shape index: {}]
  %s5 = inlined_call_operand.vmem [shape: f32[256,32], index: 5, kind: input, shape index: {}]
  %s6 = inlined_call_operand.vmem [shape: f32[1,32], index: 6, kind: input, shape index: {}]
  %s7 = inlined_call_operand.hbm [shape: f32[1,32], index: 7, kind: output, shape index: {}]
  %s8 = sld [smem:[#allocation0]]
  $region42: #{tpu_custom_call.1} parent=0
    _
  %s10 = ssub.s32 1, %s8
  %s11 = scalar_select 0, %s10, %s8
  $region1: #{tpu_custom_call.1} parent=0
    #allocation2 [shape = 'u8[262144]{0}', space=vmem, size = 0x40000, scoped, tag = 'input window, operand 3, single buffered']
    #allocation3 [shape = 's32[1]{0}', space=sflag, size = 0x4, scoped, tag = 'scoped memory for tpu_custom_call.1']
    #allocation4 [shape = 's32[1]{0}', space=sflag, size = 0x4, scoped, tag = 'scoped memory for tpu_custom_call.1']
    #allocation5 [shape = 'u8[512]{0}', space=vmem, size = 0x400, scoped, tag = 'output window, operand 0, single buffered']
    %12 = vsyncpa [#allocation3], 0
    %13 = vsyncpa [#allocation4], 0
    // Predicated region
    $region2: #{tpu_custom_call.1} parent=1 // pred_check
      _
    $region3: #{tpu_custom_call.1} parent=1 // pred_check_branch
      %15 = sbr.rel (0) target = $region5
    $region4: #{tpu_custom_call.1} parent=1 // pred_region
      _
    $region5: #{tpu_custom_call.1} parent=1 // pred_fallthru
      _
    // Predicated region
    $region6: #{tpu_custom_call.1} parent=1 // pred_check
      _
    $region7: #{tpu_custom_call.1} parent=1 // pred_check_branch
      %17 = sbr.rel (0) target = $region9
    $region8: #{tpu_custom_call.1} parent=1 // pred_region
      _
    $region9: #{tpu_custom_call.1} parent=1 // pred_fallthru
      _
    // Predicated region
    $region10: #{tpu_custom_call.1} parent=1 // pred_check
      _
    $region11: #{tpu_custom_call.1} parent=1 // pred_check_branch
      %19 = sbr.rel (0) target = $region13
    $region12: #{tpu_custom_call.1} parent=1 // pred_region
      _
    $region13: #{tpu_custom_call.1} parent=1 // pred_fallthru
      _
    // Predicated region
    $region14: #{tpu_custom_call.1} parent=1 // pred_check
      _
    $region15: #{tpu_custom_call.1} parent=1 // pred_check_branch
      %21 = sbr.rel (0) target = $region17
    $region16: #{tpu_custom_call.1} parent=1 // pred_region
      %s23 = ssub.s32 8192, 8192
      %24 = vsyncadd [#allocation3], %s23
      %s25 = sshll.u32 [#allocation2], 4
      %s26 = int_to_ptr.vmem [resolvable:$true] %s25
      %31 = dma.hbm_to_vmem [thread:$0]  %s3, 8192, %s26, [#allocation3], 256, 256, 16
    $region17: #{tpu_custom_call.1} parent=1 // pred_fallthru
      _
    // Predicated region
    $region18: #{tpu_custom_call.1} parent=1 // pred_check
      _
    $region19: #{tpu_custom_call.1} parent=1 // pred_check_branch
      %33 = sbr.rel (0) target = $region21
    $region20: #{tpu_custom_call.1} parent=1 // pred_region
      _
    $region21: #{tpu_custom_call.1} parent=1 // pred_fallthru
      _
    // Predicated region
    $region22: #{tpu_custom_call.1} parent=1 // pred_check
      _
    $region23: #{tpu_custom_call.1} parent=1 // pred_check_branch
      %35 = sbr.rel (0) target = $region25
    $region24: #{tpu_custom_call.1} parent=1 // pred_region
      _
    $region25: #{tpu_custom_call.1} parent=1 // pred_fallthru
      _
    // Predicated region
    $region26: #{tpu_custom_call.1} parent=1 // pred_check
      _
    $region27: #{tpu_custom_call.1} parent=1 // pred_check_branch
      %37 = sbr.rel (0) target = $region29
    $region28: #{tpu_custom_call.1} parent=1 // pred_region
      _
    $region29: #{tpu_custom_call.1} parent=1 // pred_fallthru
      _
    // Predicated region
    $region30: #{tpu_custom_call.1} parent=1 // pred_check
      _
    $region31: #{tpu_custom_call.1} parent=1 // pred_check_branch
      %39 = sbr.rel (0) target = $region33
    $region32: #{tpu_custom_call.1} parent=1 // pred_region
      %40 = dma.done [#allocation3], 8192
    $region33: #{tpu_custom_call.1} parent=1 // pred_fallthru
      _
    %v41 = vld [vmem:[%s0] sm:$0x1]
    %v42 = vld [vmem:[%s1] sm:$0xff]
    %v43 = vld [vmem:[%s1 + $0x8] sm:$0xff]
    %v44 = vld [vmem:[%s1 + $0x10] sm:$0xff]
    %v45 = vld [vmem:[%s1 + $0x18] sm:$0xff]
    %v46 = vld [vmem:[%s1 + $0x20] sm:$0xff]
    %v47 = vld [vmem:[%s1 + $0x28] sm:$0xff]
    %v48 = vld [vmem:[%s1 + $0x30] sm:$0xff]
    %v49 = vld [vmem:[%s1 + $0x38] sm:$0xff]
    %v50 = vld [vmem:[%s1 + $0x40] sm:$0xff]
    %v51 = vld [vmem:[%s1 + $0x48] sm:$0xff]
    %v52 = vld [vmem:[%s1 + $0x50] sm:$0xff]
    %v53 = vld [vmem:[%s1 + $0x58] sm:$0xff]
    %v54 = vld [vmem:[%s1 + $0x60] sm:$0xff]
    %v55 = vld [vmem:[%s1 + $0x68] sm:$0xff]
    %v56 = vld [vmem:[%s1 + $0x70] sm:$0xff]
    %v57 = vld [vmem:[%s1 + $0x78] sm:$0xff]
    %v58 = vld [vmem:[%s1 + $0x80] sm:$0xff]
    %v59 = vld [vmem:[%s1 + $0x88] sm:$0xff]
    %v60 = vld [vmem:[%s1 + $0x90] sm:$0xff]
    %v61 = vld [vmem:[%s1 + $0x98] sm:$0xff]
    %v62 = vld [vmem:[%s1 + $0xa0] sm:$0xff]
    %v63 = vld [vmem:[%s1 + $0xa8] sm:$0xff]
    %v64 = vld [vmem:[%s1 + $0xb0] sm:$0xff]
    %v65 = vld [vmem:[%s1 + $0xb8] sm:$0xff]
    %v66 = vld [vmem:[%s1 + $0xc0] sm:$0xff]
    %v67 = vld [vmem:[%s1 + $0xc8] sm:$0xff]
    %v68 = vld [vmem:[%s1 + $0xd0] sm:$0xff]
    %v69 = vld [vmem:[%s1 + $0xd8] sm:$0xff]
    %v70 = vld [vmem:[%s1 + $0xe0] sm:$0xff]
    %v71 = vld [vmem:[%s1 + $0xe8] sm:$0xff]
    %v72 = vld [vmem:[%s1 + $0xf0] sm:$0xff]
    %v73 = vld [vmem:[%s1 + $0xf8] sm:$0xff]
    %v74 = vld [vmem:[%s2] sm:$0x3]
    %v76 = vlaneseq
    %v77 = vshrl.u32 %v76, 7
    %v78 = vsub.s32 0, %v77
    %v79 = vrot.slane %v74, %v78
    %v80 = vlaneseq
    %v81 = vshrl.u32 %v80, 7
    %v82 = vsub.s32 1, %v81
    %v83 = vrot.slane %v74, %v82
    %86 = vmatprep.subr.mxu0 %v73
    %87 = vmatpush1.msra.mxu0 %v72
    %88 = vmatprep.subr.mxu0 %v71
    %89 = vmatpush1.msra.mxu0 %v70
    %90 = vmatprep.subr.mxu0 %v69
    %91 = vmatpush1.msra.mxu0 %v68
    %92 = vmatprep.subr.mxu0 %v67
    %93 = vmatpush1.msra.mxu0 %v66
    %94 = vmatprep.subr.mxu0 %v65
    %95 = vmatpush1.msra.mxu0 %v64
    %96 = vmatprep.subr.mxu0 %v63
    %97 = vmatpush1.msra.mxu0 %v62
    %98 = vmatprep.subr.mxu0 %v61
    %99 = vmatpush1.msra.mxu0 %v60
    %100 = vmatprep.subr.mxu0 %v59
    %101 = vmatpush1.msra.mxu0 %v58
    %102 = vmatprep.subr.mxu0 %v57
    %103 = vmatpush1.msra.mxu0 %v56
    %104 = vmatprep.subr.mxu0 %v55
    %105 = vmatpush1.msra.mxu0 %v54
    %106 = vmatprep.subr.mxu0 %v53
    %107 = vmatpush1.msra.mxu0 %v52
    %108 = vmatprep.subr.mxu0 %v51
    %109 = vmatpush1.msra.mxu0 %v50
    %110 = vmatprep.subr.mxu0 %v49
    %111 = vmatpush1.msra.mxu0 %v48
    %112 = vmatprep.subr.mxu0 %v47
    %113 = vmatpush1.msra.mxu0 %v46
    %114 = vmatprep.subr.mxu0 %v45
    %115 = vmatpush1.msra.mxu0 %v44
    %116 = vmatprep.subr.mxu0 %v43
    %117 = vmatpush1.msra.mxu0 %v42
    %118 = vmatprep.subr.mxu0 0.0
    %119 = vmatpush2.msra.mxu0 0.0
    %120 = vmatprep.subr.mxu0 0.0
    %121 = vmatpush2.msra.mxu0 0.0
    %122 = vmatprep.subr.mxu0 0.0
    %123 = vmatpush2.msra.mxu0 0.0
    %124 = vmatprep.subr.mxu0 0.0
    %125 = vmatpush2.msra.mxu0 0.0
    %126 = vmatprep.subr.mxu0 0.0
    %127 = vmatpush2.msra.mxu0 0.0
    %128 = vmatprep.subr.mxu0 0.0
    %129 = vmatpush2.msra.mxu0 0.0
    %130 = vmatprep.subr.mxu0 0.0
    %131 = vmatpush2.msra.mxu0 0.0
    %132 = vmatprep.subr.mxu0 0.0
    %133 = vmatpush2.msra.mxu0 0.0
    %134 = vmatprep.subr.mxu0 0.0
    %135 = vmatpush2.msra.mxu0 0.0
    %136 = vmatprep.subr.mxu0 0.0
    %137 = vmatpush2.msra.mxu0 0.0
    %138 = vmatprep.subr.mxu0 0.0
    %139 = vmatpush2.msra.mxu0 0.0
    %140 = vmatprep.subr.mxu0 0.0
    %141 = vmatpush2.msra.mxu0 0.0
    %142 = vmatprep.subr.mxu0 0.0
    %143 = vmatpush2.msra.mxu0 0.0
    %144 = vmatprep.subr.mxu0 0.0
    %145 = vmatpush2.msra.mxu0 0.0
    %146 = vmatprep.subr.mxu0 0.0
    %147 = vmatpush2.msra.mxu0 0.0
    %148 = vmatprep.subr.mxu0 0.0
    %149 = vmatpush2.msra.mxu0 0.0
    %150 = vmatprep.mubr.f32.mxu0 0.0
    %151 = vmatmul.mubr.f32.gmra.mxu0 %v41
    %v152 = vpop.f32.mrf.mxu0
    %v153 = vadd.f32 %v79, %v152
    %v154 = vpop.f32.mrf.mxu0
    %v155 = vadd.f32 %v83, %v154
    %156 = vdwg.mxu0
    %v157 = vmax.f32 %v153, 0.0
    %v158 = vmax.f32 %v155, 0.0
    %v159 = vld [vmem:[#allocation2] sm:$0xff]
    %v160 = vld [vmem:[#allocation2 + $0x8] sm:$0xff]
    %v161 = vld [vmem:[#allocation2 + $0x10] sm:$0xff]
    %v162 = vld [vmem:[#allocation2 + $0x18] sm:$0xff]
    %v163 = vld [vmem:[#allocation2 + $0x20] sm:$0xff]
    %v164 = vld [vmem:[#allocation2 + $0x28] sm:$0xff]
    %v165 = vld [vmem:[#allocation2 + $0x30] sm:$0xff]
    %v166 = vld [vmem:[#allocation2 + $0x38] sm:$0xff]
    %v167 = vld [vmem:[#allocation2 + $0x40] sm:$0xff]
    %v168 = vld [vmem:[#allocation2 + $0x48] sm:$0xff]
    %v169 = vld [vmem:[#allocation2 + $0x50] sm:$0xff]
    %v170 = vld [vmem:[#allocation2 + $0x58] sm:$0xff]
    %v171 = vld [vmem:[#allocation2 + $0x60] sm:$0xff]
    %v172 = vld [vmem:[#allocation2 + $0x68] sm:$0xff]
    %v173 = vld [vmem:[#allocation2 + $0x70] sm:$0xff]
    %v174 = vld [vmem:[#allocation2 + $0x78] sm:$0xff]
    %v175 = vld [vmem:[#allocation2 + $0x80] sm:$0xff]
    %v176 = vld [vmem:[#allocation2 + $0x88] sm:$0xff]
    %v177 = vld [vmem:[#allocation2 + $0x90] sm:$0xff]
    %v178 = vld [vmem:[#allocation2 + $0x98] sm:$0xff]
    %v179 = vld [vmem:[#allocation2 + $0xa0] sm:$0xff]
    %v180 = vld [vmem:[#allocation2 + $0xa8] sm:$0xff]
    %v181 = vld [vmem:[#allocation2 + $0xb0] sm:$0xff]
    %v182 = vld [vmem:[#allocation2 + $0xb8] sm:$0xff]
    %v183 = vld [vmem:[#allocation2 + $0xc0] sm:$0xff]
    %v184 = vld [vmem:[#allocation2 + $0xc8] sm:$0xff]
    %v185 = vld [vmem:[#allocation2 + $0xd0] sm:$0xff]
    %v186 = vld [vmem:[#allocation2 + $0xd8] sm:$0xff]
    %v187 = vld [vmem:[#allocation2 + $0xe0] sm:$0xff]
    %v188 = vld [vmem:[#allocation2 + $0xe8] sm:$0xff]
    %v189 = vld [vmem:[#allocation2 + $0xf0] sm:$0xff]
    %v190 = vld [vmem:[#allocation2 + $0xf8] sm:$0xff]
    %v191 = vld [vmem:[#allocation2 + $0x100] sm:$0xff]
    %v192 = vld [vmem:[#allocation2 + $0x108] sm:$0xff]
    %v193 = vld [vmem:[#allocation2 + $0x110] sm:$0xff]
    %v194 = vld [vmem:[#allocation2 + $0x118] sm:$0xff]
    %v195 = vld [vmem:[#allocation2 + $0x120] sm:$0xff]
    %v196 = vld [vmem:[#allocation2 + $0x128] sm:$0xff]
    %v197 = vld [vmem:[#allocation2 + $0x130] sm:$0xff]
    %v198 = vld [vmem:[#allocation2 + $0x138] sm:$0xff]
    %v199 = vld [vmem:[#allocation2 + $0x140] sm:$0xff]
    %v200 = vld [vmem:[#allocation2 + $0x148] sm:$0xff]
    %v201 = vld [vmem:[#allocation2 + $0x150] sm:$0xff]
    %v202 = vld [vmem:[#allocation2 + $0x158] sm:$0xff]
    %v203 = vld [vmem:[#allocation2 + $0x160] sm:$0xff]
    %v204 = vld [vmem:[#allocation2 + $0x168] sm:$0xff]
    %v205 = vld [vmem:[#allocation2 + $0x170] sm:$0xff]
    %v206 = vld [vmem:[#allocation2 + $0x178] sm:$0xff]
    %v207 = vld [vmem:[#allocation2 + $0x180] sm:$0xff]
    %v208 = vld [vmem:[#allocation2 + $0x188] sm:$0xff]
    %v209 = vld [vmem:[#allocation2 + $0x190] sm:$0xff]
    %v210 = vld [vmem:[#allocation2 + $0x198] sm:$0xff]
    %v211 = vld [vmem:[#allocation2 + $0x1a0] sm:$0xff]
    %v212 = vld [vmem:[#allocation2 + $0x1a8] sm:$0xff]
    %v213 = vld [vmem:[#allocation2 + $0x1b0] sm:$0xff]
    %v214 = vld [vmem:[#allocation2 + $0x1b8] sm:$0xff]
    %v215 = vld [vmem:[#allocation2 + $0x1c0] sm:$0xff]
    %v216 = vld [vmem:[#allocation2 + $0x1c8] sm:$0xff]
    %v217 = vld [vmem:[#allocation2 + $0x1d0] sm:$0xff]
    %v218 = vld [vmem:[#allocation2 + $0x1d8] sm:$0xff]
    %v219 = vld [vmem:[#allocation2 + $0x1e0] sm:$0xff]
    %v220 = vld [vmem:[#allocation2 + $0x1e8] sm:$0xff]
    %v221 = vld [vmem:[#allocation2 + $0x1f0] sm:$0xff]
    %v222 = vld [vmem:[#allocation2 + $0x1f8] sm:$0xff]
    %v223 = vld [vmem:[%s4] sm:$0x3]
    %v225 = vlaneseq
    %v226 = vshrl.u32 %v225, 7
    %v227 = vsub.s32 0, %v226
    %v228 = vrot.slane %v223, %v227
    %v229 = vlaneseq
    %v230 = vshrl.u32 %v229, 7
    %v231 = vsub.s32 1, %v230
    %v232 = vrot.slane %v223, %v231
    %235 = vmatprep.subr.mxu0 %v190
    %236 = vmatpush1.msra.mxu0 %v189
    %237 = vmatprep.subr.mxu0 %v188
    %238 = vmatpush1.msra.mxu0 %v187
    %239 = vmatprep.subr.mxu0 %v186
    %240 = vmatpush1.msra.mxu0 %v185
    %241 = vmatprep.subr.mxu0 %v184
    %242 = vmatpush1.msra.mxu0 %v183
    %243 = vmatprep.subr.mxu0 %v182
    %244 = vmatpush1.msra.mxu0 %v181
    %245 = vmatprep.subr.mxu0 %v180
    %246 = vmatpush1.msra.mxu0 %v179
    %247 = vmatprep.subr.mxu0 %v178
    %248 = vmatpush1.msra.mxu0 %v177
    %249 = vmatprep.subr.mxu0 %v176
    %250 = vmatpush1.msra.mxu0 %v175
    %251 = vmatprep.subr.mxu0 %v174
    %252 = vmatpush1.msra.mxu0 %v173
    %253 = vmatprep.subr.mxu0 %v172
    %254 = vmatpush1.msra.mxu0 %v171
    %255 = vmatprep.subr.mxu0 %v170
    %256 = vmatpush1.msra.mxu0 %v169
    %257 = vmatprep.subr.mxu0 %v168
    %258 = vmatpush1.msra.mxu0 %v167
    %259 = vmatprep.subr.mxu0 %v166
    %260 = vmatpush1.msra.mxu0 %v165
    %261 = vmatprep.subr.mxu0 %v164
    %262 = vmatpush1.msra.mxu0 %v163
    %263 = vmatprep.subr.mxu0 %v162
    %264 = vmatpush1.msra.mxu0 %v161
    %265 = vmatprep.subr.mxu0 %v160
    %266 = vmatpush1.msra.mxu0 %v159
    %267 = vmatprep.subr.mxu0 %v222
    %268 = vmatpush2.msra.mxu0 %v221
    %269 = vmatprep.subr.mxu0 %v220
    %270 = vmatpush2.msra.mxu0 %v219
    %271 = vmatprep.subr.mxu0 %v218
    %272 = vmatpush2.msra.mxu0 %v217
    %273 = vmatprep.subr.mxu0 %v216
    %274 = vmatpush2.msra.mxu0 %v215
    %275 = vmatprep.subr.mxu0 %v214
    %276 = vmatpush2.msra.mxu0 %v213
    %277 = vmatprep.subr.mxu0 %v212
    %278 = vmatpush2.msra.mxu0 %v211
    %279 = vmatprep.subr.mxu0 %v210
    %280 = vmatpush2.msra.mxu0 %v209
    %281 = vmatprep.subr.mxu0 %v208
    %282 = vmatpush2.msra.mxu0 %v207
    %283 = vmatprep.subr.mxu0 %v206
    %284 = vmatpush2.msra.mxu0 %v205
    %285 = vmatprep.subr.mxu0 %v204
    %286 = vmatpush2.msra.mxu0 %v203
    %287 = vmatprep.subr.mxu0 %v202
    %288 = vmatpush2.msra.mxu0 %v201
    %289 = vmatprep.subr.mxu0 %v200
    %290 = vmatpush2.msra.mxu0 %v199
    %291 = vmatprep.subr.mxu0 %v198
    %292 = vmatpush2.msra.mxu0 %v197
    %293 = vmatprep.subr.mxu0 %v196
    %294 = vmatpush2.msra.mxu0 %v195
    %295 = vmatprep.subr.mxu0 %v194
    %296 = vmatpush2.msra.mxu0 %v193
    %297 = vmatprep.subr.mxu0 %v192
    %298 = vmatpush2.msra.mxu0 %v191
    %299 = vmatprep.mubr.f32.mxu0 %v158
    %300 = vmatmul.mubr.f32.gmra.mxu0 %v157
    %v301 = vpop.f32.mrf.mxu0
    %v302 = vadd.f32 %v228, %v301
    %v303 = vpop.f32.mrf.mxu0
    %v304 = vadd.f32 %v232, %v303
    %305 = vdwg.mxu0
    %v306 = vmax.f32 %v302, 0.0
    %v307 = vmax.f32 %v304, 0.0
    %v308 = vld [vmem:[%s5] sm:$0xff]
    %v309 = vld [vmem:[%s5 + $0x8] sm:$0xff]
    %v310 = vld [vmem:[%s5 + $0x10] sm:$0xff]
    %v311 = vld [vmem:[%s5 + $0x18] sm:$0xff]
    %v312 = vld [vmem:[%s5 + $0x20] sm:$0xff]
    %v313 = vld [vmem:[%s5 + $0x28] sm:$0xff]
    %v314 = vld [vmem:[%s5 + $0x30] sm:$0xff]
    %v315 = vld [vmem:[%s5 + $0x38] sm:$0xff]
    %v316 = vld [vmem:[%s5 + $0x40] sm:$0xff]
    %v317 = vld [vmem:[%s5 + $0x48] sm:$0xff]
    %v318 = vld [vmem:[%s5 + $0x50] sm:$0xff]
    %v319 = vld [vmem:[%s5 + $0x58] sm:$0xff]
    %v320 = vld [vmem:[%s5 + $0x60] sm:$0xff]
    %v321 = vld [vmem:[%s5 + $0x68] sm:$0xff]
    %v322 = vld [vmem:[%s5 + $0x70] sm:$0xff]
    %v323 = vld [vmem:[%s5 + $0x78] sm:$0xff]
    %v324 = vld [vmem:[%s5 + $0x80] sm:$0xff]
    %v325 = vld [vmem:[%s5 + $0x88] sm:$0xff]
    %v326 = vld [vmem:[%s5 + $0x90] sm:$0xff]
    %v327 = vld [vmem:[%s5 + $0x98] sm:$0xff]
    %v328 = vld [vmem:[%s5 + $0xa0] sm:$0xff]
    %v329 = vld [vmem:[%s5 + $0xa8] sm:$0xff]
    %v330 = vld [vmem:[%s5 + $0xb0] sm:$0xff]
    %v331 = vld [vmem:[%s5 + $0xb8] sm:$0xff]
    %v332 = vld [vmem:[%s5 + $0xc0] sm:$0xff]
    %v333 = vld [vmem:[%s5 + $0xc8] sm:$0xff]
    %v334 = vld [vmem:[%s5 + $0xd0] sm:$0xff]
    %v335 = vld [vmem:[%s5 + $0xd8] sm:$0xff]
    %v336 = vld [vmem:[%s5 + $0xe0] sm:$0xff]
    %v337 = vld [vmem:[%s5 + $0xe8] sm:$0xff]
    %v338 = vld [vmem:[%s5 + $0xf0] sm:$0xff]
    %v339 = vld [vmem:[%s5 + $0xf8] sm:$0xff]
    %v340 = vld [vmem:[%s6] sm:$0x1]
    %341 = vmatprep.subr.mxu0 0.0
    %342 = vmatpush1.msra.mxu0 %v323
    %343 = vmatprep.subr.mxu0 0.0
    %344 = vmatpush1.msra.mxu0 %v322
    %345 = vmatprep.subr.mxu0 0.0
    %346 = vmatpush1.msra.mxu0 %v321
    %347 = vmatprep.subr.mxu0 0.0
    %348 = vmatpush1.msra.mxu0 %v320
    %349 = vmatprep.subr.mxu0 0.0
    %350 = vmatpush1.msra.mxu0 %v319
    %351 = vmatprep.subr.mxu0 0.0
    %352 = vmatpush1.msra.mxu0 %v318
    %353 = vmatprep.subr.mxu0 0.0
    %354 = vmatpush1.msra.mxu0 %v317
    %355 = vmatprep.subr.mxu0 0.0
    %356 = vmatpush1.msra.mxu0 %v316
    %357 = vmatprep.subr.mxu0 0.0
    %358 = vmatpush1.msra.mxu0 %v315
    %359 = vmatprep.subr.mxu0 0.0
    %360 = vmatpush1.msra.mxu0 %v314
    %361 = vmatprep.subr.mxu0 0.0
    %362 = vmatpush1.msra.mxu0 %v313
    %363 = vmatprep.subr.mxu0 0.0
    %364 = vmatpush1.msra.mxu0 %v312
    %365 = vmatprep.subr.mxu0 0.0
    %366 = vmatpush1.msra.mxu0 %v311
    %367 = vmatprep.subr.mxu0 0.0
    %368 = vmatpush1.msra.mxu0 %v310
    %369 = vmatprep.subr.mxu0 0.0
    %370 = vmatpush1.msra.mxu0 %v309
    %371 = vmatprep.subr.mxu0 0.0
    %372 = vmatpush1.msra.mxu0 %v308
    %373 = vmatprep.subr.mxu0 0.0
    %374 = vmatpush2.msra.mxu0 %v339
    %375 = vmatprep.subr.mxu0 0.0
    %376 = vmatpush2.msra.mxu0 %v338
    %377 = vmatprep.subr.mxu0 0.0
    %378 = vmatpush2.msra.mxu0 %v337
    %379 = vmatprep.subr.mxu0 0.0
    %380 = vmatpush2.msra.mxu0 %v336
    %381 = vmatprep.subr.mxu0 0.0
    %382 = vmatpush2.msra.mxu0 %v335
    %383 = vmatprep.subr.mxu0 0.0
    %384 = vmatpush2.msra.mxu0 %v334
    %385 = vmatprep.subr.mxu0 0.0
    %386 = vmatpush2.msra.mxu0 %v333
    %387 = vmatprep.subr.mxu0 0.0
    %388 = vmatpush2.msra.mxu0 %v332
    %389 = vmatprep.subr.mxu0 0.0
    %390 = vmatpush2.msra.mxu0 %v331
    %391 = vmatprep.subr.mxu0 0.0
    %392 = vmatpush2.msra.mxu0 %v330
    %393 = vmatprep.subr.mxu0 0.0
    %394 = vmatpush2.msra.mxu0 %v329
    %395 = vmatprep.subr.mxu0 0.0
    %396 = vmatpush2.msra.mxu0 %v328
    %397 = vmatprep.subr.mxu0 0.0
    %398 = vmatpush2.msra.mxu0 %v327
    %399 = vmatprep.subr.mxu0 0.0
    %400 = vmatpush2.msra.mxu0 %v326
    %401 = vmatprep.subr.mxu0 0.0
    %402 = vmatpush2.msra.mxu0 %v325
    %403 = vmatprep.subr.mxu0 0.0
    %404 = vmatpush2.msra.mxu0 %v324
    %405 = vmatprep.mubr.f32.mxu0 %v307
    %406 = vmatmul.mubr.f32.gmra.mxu0 %v306
    %v407 = vpop.f32.mrf.mxu0
    %v408 = vadd.f32 %v340, %v407
    %v409 = vpop.f32.mrf.mxu0
    %410 = vdwg.mxu0
    %vm411 = vcmask 253952
    %412 = vst.msk [vmem:[#allocation5] sm:$0x1] %vm411, %v408
    // Predicated region
    $region34: #{tpu_custom_call.1} parent=1 // pred_check
      _
    $region35: #{tpu_custom_call.1} parent=1 // pred_check_branch
      %414 = sbr.rel (0) target = $region37
    $region36: #{tpu_custom_call.1} parent=1 // pred_region
      %s416 = ssub.s32 16, 16
      %417 = vsyncadd [#allocation4], %s416
      %s419 = sshll.u32 [#allocation5], 4
      %s420 = int_to_ptr.vmem [resolvable:$true] %s419
      %422 = dma.vmem_to_hbm [thread:$0]  %s420, 16, %s7, [#allocation4]
    $region37: #{tpu_custom_call.1} parent=1 // pred_fallthru
      _
    // Predicated region
    $region38: #{tpu_custom_call.1} parent=1 // pred_check
      _
    $region39: #{tpu_custom_call.1} parent=1 // pred_check_branch
      %424 = sbr.rel (0) target = $region41
    $region40: #{tpu_custom_call.1} parent=1 // pred_region
      %425 = dma.done [#allocation4], 16
    $region41: #{tpu_custom_call.1} parent=1 // pred_fallthru
      _
    %426 = vsyncpa [#allocation3], 1
    %427 = vsyncpa [#allocation4], 1

</llo_original>
